<compile_context>
chip_gen: v5e
topology: v5e:2x2
jax: 0.10.0
libtpu: 0.0.40
codegen_flags: <defaults>
</compile_context>

<pallas_src>
import functools

import jax
import jax.numpy as jnp
from jax.experimental import pallas as pl
from jax.experimental.pallas import tpu as pltpu


def _round_up(x, m):
    return ((x + m - 1) // m) * m


def _vmem_capacity_bytes():
    """Generation-aware VMEM capacity (v5e/v6e: 128 MiB, v7x: 64 MiB per TC)."""
    try:
        return int(pltpu.get_tpu_info().vmem_capacity_bytes)
    except Exception:
        return 64 << 20  # conservative fallback (v7x per-TensorCore VMEM)


def _two_layer_kernel(x_ref, w1_ref, b1_ref, w2_ref, b2_ref, o_ref):
    # Cast x to the MXU dtype in-kernel (no-op for f32, VPU cast for bf16 -> hides
    # under the MXU and avoids a separate un-hidden XLA cast pass over x in HBM).
    x = x_ref[...].astype(w1_ref.dtype)
    # h1 = relu(x @ W1 + b1): MXU matmul with f32 accumulation, f32 epilogue on VPU.
    h1 = jnp.dot(x, w1_ref[...], preferred_element_type=jnp.float32)
    h1 = jnp.maximum(h1 + b1_ref[...], 0.0)                     # (tile_n, H1p) + (1, H1p)
    # y = h1 @ W2 + b2 (h1 rounded to the MXU dtype; no-op when weights are f32).
    y = jnp.dot(h1.astype(w2_ref.dtype), w2_ref[...],
                preferred_element_type=jnp.float32)
    o_ref[...] = (y + b2_ref[...]).astype(o_ref.dtype)


def prepare_params(w1, b1, w2, b2, *, mxu_dtype=jnp.bfloat16):
    """Pad (to 128-lane multiples) and cast the parameters ONCE, outside the forward.

    w1: (D_in, H1)  b1: (H1,)/(1,H1)  w2: (H1, D_out)  b2: (D_out,)/(1,D_out)
    Zero padding keeps the math exact: padded W1 rows/cols contribute 0, padded h1
    columns are relu(0+0)=0, padded W2 rows contribute 0, padded outputs are sliced.
    """
    D_in, H1 = w1.shape
    D_out = w2.shape[1]
    D_in_p = _round_up(D_in, 128)
    H1p = _round_up(H1, 128)
    D_out_p = _round_up(D_out, 128)
    b1 = jnp.reshape(b1, (1, H1))
    b2 = jnp.reshape(b2, (1, D_out))
    w1p = jnp.zeros((D_in_p, H1p), mxu_dtype).at[:D_in, :H1].set(w1.astype(mxu_dtype))
    b1p = jnp.zeros((1, H1p), jnp.float32).at[:, :H1].set(b1.astype(jnp.float32))
    w2p = jnp.zeros((H1p, D_out_p), mxu_dtype).at[:H1, :D_out].set(w2.astype(mxu_dtype))
    b2p = jnp.zeros((1, D_out_p), jnp.float32).at[:, :D_out].set(b2.astype(jnp.float32))
    return w1p, b1p, w2p, b2p, D_out


@functools.partial(
    jax.jit,
    static_argnames=("d_out", "tile_n", "out_dtype", "single_buffer_weights"),
)
def _two_layer_forward(x, w1p, b1p, w2p, b2p, *, d_out, tile_n=256,
                       out_dtype=jnp.float32, single_buffer_weights=True):
    N, D_in = x.shape
    D_in_p, H1p = w1p.shape
    D_out_p = w2p.shape[1]
    wbytes = jnp.dtype(w1p.dtype).itemsize
    out_bytes = jnp.dtype(out_dtype).itemsize

    # --- Batch tile: sublane-aligned (8 for f32 out, 16 for bf16 out), MXU-friendly. ---
    sublane = 8 if out_bytes >= 4 else 16
    tn = max(sublane, min(int(tile_n), _round_up(N, sublane)))
    tn = (tn // sublane) * sublane
    if tn >= 256:
        tn = (tn // 256) * 256

    # --- Generation-aware VMEM budgeting. ---
    cap = _vmem_capacity_bytes()
    budget = int(cap * 0.85)

    def need_bytes(tn_, td_):
        dblk = D_out_p // td_
        w1_bufs = 1 if single_buffer_weights else 2
        w2_bufs = 1 if (single_buffer_weights and dblk == 1) else 2
        return (w1_bufs * (D_in_p * H1p * wbytes + H1p * 4)          # W1, b1
                + w2_bufs * (H1p * td_ * wbytes + td_ * 4)           # W2 tile, b2 tile
                + 2 * tn_ * D_in_p * 4                               # x tile (f32, 2 bufs)
                + 2 * tn_ * td_ * out_bytes                          # out tile (2 bufs)
                + tn_ * H1p * 4                                      # h1 f32 intermediate
                + tn_ * td_ * 4)                                     # y f32 intermediate

    # Largest 128-multiple divisor of D_out_p whose footprint fits the budget.
    k = D_out_p // 128
    cands = [d * 128 for d in range(k, 0, -1) if k % d == 0]
    tile_dout = cands[-1]
    for td in cands:
        if need_bytes(tn, td) <= budget:
            tile_dout = td
            break
    # If even the smallest D_out tile overflows, shrink the batch tile.
    while need_bytes(tn, tile_dout) > budget and tn > sublane:
        tn = max(sublane, (tn // 2 // sublane) * sublane)
    # TODO(synk): if W1 alone exceeds the VMEM budget, add an H1 (K) reduction grid axis
    # with an f32 accumulator scratch + pl.when init/finalize instead of keeping it resident.

    # --- Pad x (batch to tile multiple, D_in to lane multiple); x stays f32. ---
    n_pad = _round_up(N, tn)
    if n_pad != N or D_in_p != D_in:
        x = jnp.pad(x, ((0, n_pad - N), (0, D_in_p - D_in)))
    n_blocks = n_pad // tn
    dout_blocks = D_out_p // tile_dout

    need = need_bytes(tn, tile_dout)
    vmem_limit = int(min(max(need + (8 << 20), 32 << 20),
                         max(cap - (8 << 20), 32 << 20)))

    def const_spec(shape):
        # Resident operand: constant index_map; single-buffer it to halve VMEM.
        if single_buffer_weights:
            return pl.BlockSpec(shape, lambda i, j: (0, 0),
                                pipeline_mode=pl.Buffered(1))
        return pl.BlockSpec(shape, lambda i, j: (0, 0))

    if dout_blocks == 1 and single_buffer_weights:
        w2_spec = pl.BlockSpec((H1p, tile_dout), lambda i, j: (0, j),
                               pipeline_mode=pl.Buffered(1))
        b2_spec = pl.BlockSpec((1, tile_dout), lambda i, j: (0, j),
                               pipeline_mode=pl.Buffered(1))
    else:
        w2_spec = pl.BlockSpec((H1p, tile_dout), lambda i, j: (0, j))
        b2_spec = pl.BlockSpec((1, tile_dout), lambda i, j: (0, j))

    cost = pl.CostEstimate(
        flops=int(2 * n_pad * (D_in_p * H1p + H1p * D_out_p)),
        transcendentals=0,
        bytes_accessed=int(n_pad * D_in_p * 4
                           + (D_in_p * H1p + H1p * D_out_p) * wbytes
                           + (H1p + D_out_p) * 4
                           + n_pad * D_out_p * out_bytes),
    )

    out_p = pl.pallas_call(
        _two_layer_kernel,
        out_shape=jax.ShapeDtypeStruct((n_pad, D_out_p), out_dtype),
        grid=(n_blocks, dout_blocks),
        in_specs=[
            pl.BlockSpec((tn, D_in_p), lambda i, j: (i, 0)),   # streamed x tile (f32)
            const_spec((D_in_p, H1p)),                         # resident W1
            const_spec((1, H1p)),                              # resident b1
            w2_spec,                                           # W2 (resident or D_out-tiled)
            b2_spec,                                           # b2
        ],
        out_specs=pl.BlockSpec((tn, tile_dout), lambda i, j: (i, j)),  # lane-dense slab
        compiler_params=pltpu.CompilerParams(
            # Both axes are fully independent; lets v7x shard them across its 2 TCs
            # (measured no-op on v5e/v6e). Needs >=2 grid steps to actually split.
            dimension_semantics=("parallel", "parallel"),
            vmem_limit_bytes=vmem_limit,
        ),
        cost_estimate=cost,
    )(x, w1p, b1p, w2p, b2p)

    # Slice away batch / lane padding.
    return out_p[:N, :d_out]


def two_layer_net_apply(x, w1p, b1p, w2p, b2p, *, d_out, tile_n=256,
                        out_dtype=jnp.float32):
    """Forward with pre-padded params. Retries without pl.Buffered(1) if unsupported."""
    try:
        return _two_layer_forward(x, w1p, b1p, w2p, b2p, d_out=d_out, tile_n=tile_n,
                                  out_dtype=out_dtype, single_buffer_weights=True)
    except Exception:
        return _two_layer_forward(x, w1p, b1p, w2p, b2p, d_out=d_out, tile_n=tile_n,
                                  out_dtype=out_dtype, single_buffer_weights=False)


def two_layer_net(x, w1, b1, w2, b2, *, mxu_dtype=jnp.bfloat16, tile_n=256,
                  out_dtype=jnp.float32):
    """Convenience: pad params then run. For repeated calls, call prepare_params once
    and reuse two_layer_net_apply (padding/casting is the per-init cost, not per-call)."""
    w1p, b1p, w2p, b2p, d_out = prepare_params(w1, b1, w2, b2, mxu_dtype=mxu_dtype)
    return two_layer_net_apply(x, w1p, b1p, w2p, b2p, d_out=d_out, tile_n=tile_n,
                               out_dtype=out_dtype)


def init_params(key, D_in, H1, D_out):
    """Deterministic init matching torch.nn.Linear's default (uniform +-1/sqrt(fan_in))."""
    k1, k2, k3, k4 = jax.random.split(key, 4)
    bound1 = 1.0 / jnp.sqrt(D_in)
    bound2 = 1.0 / jnp.sqrt(H1)
    w1 = jax.random.uniform(k1, (D_in, H1), jnp.float32, -bound1, bound1)
    b1 = jax.random.uniform(k2, (1, H1), jnp.float32, -bound1, bound1)
    w2 = jax.random.uniform(k3, (H1, D_out), jnp.float32, -bound2, bound2)
    b2 = jax.random.uniform(k4, (1, D_out), jnp.float32, -bound2, bound2)
    return w1, b1, w2, b2


if __name__ == "__main__":
    # Small shapes implied by the module: D_in -> H1 -> D_out (H2 is unused in forward).
    # NOTE: at these toy sizes the call is ~pure fixed overhead; the tiling / bf16 /
    # residency machinery pays off at realistic N / H1 (sweep tile_n in 256-1024).
    N, D_in, H1, D_out = 8, 32, 64, 16

    key = jax.random.PRNGKey(0)
    kx, kp = jax.random.split(key)
    x = jax.random.normal(kx, (N, D_in), jnp.float32)
    w1, b1, w2, b2 = init_params(kp, D_in, H1, D_out)

    # Pure-JAX reference.
    y_ref = jnp.maximum(x @ w1 + b1, 0.0) @ w2 + b2

    # Default path: bf16 MXU inputs, f32 accumulation + f32 epilogue.
    y = two_layer_net(x, w1, b1, w2, b2)
    jax.block_until_ready(y)
    assert y.shape == (N, D_out)
    assert jnp.allclose(y, y_ref, atol=2e-2, rtol=2e-2)

    # Exact f32 MXU path.
    y_f32 = two_layer_net(x, w1, b1, w2, b2, mxu_dtype=jnp.float32)
    jax.block_until_ready(y_f32)
    assert jnp.allclose(y_f32, y_ref, atol=1e-5, rtol=1e-5)

    print("KERNEL_OK")
</pallas_src>

<mosaic_0001>
module attributes {stable_mosaic.version = 11 : i64} {
  func.func @_two_layer_kernel(%arg0: i32, %arg1: i32, %arg2: memref<8x128xf32, #tpu.memory_space<vmem>>, %arg3: memref<128x128xbf16, #tpu.memory_space<vmem>>, %arg4: memref<1x128xf32, #tpu.memory_space<vmem>>, %arg5: memref<128x128xbf16, #tpu.memory_space<vmem>>, %arg6: memref<1x128xf32, #tpu.memory_space<vmem>>, %arg7: memref<8x128xf32, #tpu.memory_space<vmem>>) attributes {dimension_semantics = [#tpu.dimension_semantics<parallel>, #tpu.dimension_semantics<parallel>], iteration_bounds = array<i64: 1, 1>, scalar_prefetch = 0 : i64, scratch_operands = 0 : i64, tpu.core_type = #tpu.core_type<tc>, window_params = [{transform_indices = @transform_0, window_bounds = array<i64: 8, 128>}, {pipeline_mode = #tpu.pipeline_mode<synchronous>, transform_indices = @transform_1, window_bounds = array<i64: 128, 128>}, {pipeline_mode = #tpu.pipeline_mode<synchronous>, transform_indices = @transform_2, window_bounds = array<i64: 1, 128>}, {pipeline_mode = #tpu.pipeline_mode<synchronous>, transform_indices = @transform_3, window_bounds = array<i64: 128, 128>}, {pipeline_mode = #tpu.pipeline_mode<synchronous>, transform_indices = @transform_4, window_bounds = array<i64: 1, 128>}, {transform_indices = @transform_5, window_bounds = array<i64: 8, 128>}]} {
    %c0 = arith.constant 0 : index
    %c0_0 = arith.constant 0 : index
    %0 = vector.load %arg2[%c0, %c0_0] : memref<8x128xf32, #tpu.memory_space<vmem>>, vector<8x128xf32>
    %1 = arith.truncf %0 : vector<8x128xf32> to vector<8x128xbf16>
    %c0_1 = arith.constant 0 : index
    %c0_2 = arith.constant 0 : index
    %2 = vector.load %arg3[%c0_1, %c0_2] : memref<128x128xbf16, #tpu.memory_space<vmem>>, vector<128x128xbf16>
    %cst = arith.constant dense<0.000000e+00> : vector<8x128xf32>
    %3 = tpu.matmul %1, %2, %cst {dimension_numbers = #tpu.dot_dimension_numbers<[1], [0], [0], [1], [0, 0, 1, 1], [], []>} : vector<8x128xbf16>, vector<128x128xbf16>, vector<8x128xf32> -> vector<8x128xf32>
    %c0_3 = arith.constant 0 : index
    %c0_4 = arith.constant 0 : index
    %4 = vector.load %arg4[%c0_3, %c0_4] : memref<1x128xf32, #tpu.memory_space<vmem>>, vector<1x128xf32>
    %5 = vector.broadcast %4 : vector<1x128xf32> to vector<8x128xf32>
    %6 = arith.addf %3, %5 : vector<8x128xf32>
    %cst_5 = arith.constant 0.000000e+00 : f32
    %7 = vector.broadcast %cst_5 : f32 to vector<8x128xf32>
    %8 = arith.maximumf %6, %7 : vector<8x128xf32>
    %9 = arith.truncf %8 : vector<8x128xf32> to vector<8x128xbf16>
    %c0_6 = arith.constant 0 : index
    %c0_7 = arith.constant 0 : index
    %10 = vector.load %arg5[%c0_6, %c0_7] : memref<128x128xbf16, #tpu.memory_space<vmem>>, vector<128x128xbf16>
    %cst_8 = arith.constant dense<0.000000e+00> : vector<8x128xf32>
    %11 = tpu.matmul %9, %10, %cst_8 {dimension_numbers = #tpu.dot_dimension_numbers<[1], [0], [0], [1], [0, 0, 1, 1], [], []>} : vector<8x128xbf16>, vector<128x128xbf16>, vector<8x128xf32> -> vector<8x128xf32>
    %c0_9 = arith.constant 0 : index
    %c0_10 = arith.constant 0 : index
    %12 = vector.load %arg6[%c0_9, %c0_10] : memref<1x128xf32, #tpu.memory_space<vmem>>, vector<1x128xf32>
    %13 = vector.broadcast %12 : vector<1x128xf32> to vector<8x128xf32>
    %14 = arith.addf %11, %13 : vector<8x128xf32>
    %c0_11 = arith.constant 0 : index
    %c0_12 = arith.constant 0 : index
    %15 = vector.load %arg7[%c0_11, %c0_12] : memref<8x128xf32, #tpu.memory_space<vmem>>, vector<8x128xf32>
    tpu.vector_store %arg7[%c0_11, %c0_12], %14 {strides = array<i32>} : memref<8x128xf32, #tpu.memory_space<vmem>>, vector<8x128xf32>,
    return
  }
  func.func @transform_0(%arg0: i32, %arg1: i32) -> (i32, i32) {
    %c0_i32 = arith.constant 0 : i32
    %c0_i32_0 = arith.constant 0 : i32
    return %arg0, %c0_i32 : i32, i32
  }
  func.func @transform_1(%arg0: i32, %arg1: i32) -> (i32, i32) {
    %c0_i32 = arith.constant 0 : i32
    %c0_i32_0 = arith.constant 0 : i32
    %c0_i32_1 = arith.constant 0 : i32
    return %c0_i32, %c0_i32_0 : i32, i32
  }
  func.func @transform_2(%arg0: i32, %arg1: i32) -> (i32, i32) {
    %c0_i32 = arith.constant 0 : i32
    %c0_i32_0 = arith.constant 0 : i32
    %c0_i32_1 = arith.constant 0 : i32
    return %c0_i32, %c0_i32_0 : i32, i32
  }
  func.func @transform_3(%arg0: i32, %arg1: i32) -> (i32, i32) {
    %c0_i32 = arith.constant 0 : i32
    %c0_i32_0 = arith.constant 0 : i32
    return %c0_i32, %arg1 : i32, i32
  }
  func.func @transform_4(%arg0: i32, %arg1: i32) -> (i32, i32) {
    %c0_i32 = arith.constant 0 : i32
    %c0_i32_0 = arith.constant 0 : i32
    return %c0_i32, %arg1 : i32, i32
  }
  func.func @transform_5(%arg0: i32, %arg1: i32) -> (i32, i32) {
    %c0_i32 = arith.constant 0 : i32
    return %arg0, %arg1 : i32, i32
  }
}

module attributes {stable_mosaic.version = 11 : i64} {
  func.func @_two_layer_kernel(%arg0: i32, %arg1: i32, %arg2: memref<8x128xf32, #tpu.memory_space<vmem>>, %arg3: memref<128x128xbf16, #tpu.memory_space<vmem>>, %arg4: memref<1x128xf32, #tpu.memory_space<vmem>>, %arg5: memref<128x128xbf16, #tpu.memory_space<vmem>>, %arg6: memref<1x128xf32, #tpu.memory_space<vmem>>, %arg7: memref<8x128xf32, #tpu.memory_space<vmem>>) attributes {dimension_semantics = [#tpu.dimension_semantics<parallel>, #tpu.dimension_semantics<parallel>], iteration_bounds = array<i64: 1, 1>, scalar_prefetch = 0 : i64, scratch_operands = 0 : i64, tpu.core_type = #tpu.core_type<tc>, window_params = [{transform_indices = @transform_0, window_bounds = array<i64: 8, 128>}, {pipeline_mode = #tpu.pipeline_mode<synchronous>, transform_indices = @transform_1, window_bounds = array<i64: 128, 128>}, {pipeline_mode = #tpu.pipeline_mode<synchronous>, transform_indices = @transform_2, window_bounds = array<i64: 1, 128>}, {transform_indices = @transform_3, window_bounds = array<i64: 128, 128>}, {transform_indices = @transform_4, window_bounds = array<i64: 1, 128>}, {transform_indices = @transform_5, window_bounds = array<i64: 8, 128>}]} {
    %c0 = arith.constant 0 : index
    %c0_0 = arith.constant 0 : index
    %0 = vector.load %arg2[%c0, %c0_0] : memref<8x128xf32, #tpu.memory_space<vmem>>, vector<8x128xf32>
    %1 = arith.truncf %0 : vector<8x128xf32> to vector<8x128xbf16>
    %c0_1 = arith.constant 0 : index
    %c0_2 = arith.constant 0 : index
    %2 = vector.load %arg3[%c0_1, %c0_2] : memref<128x128xbf16, #tpu.memory_space<vmem>>, vector<128x128xbf16>
    %cst = arith.constant dense<0.000000e+00> : vector<8x128xf32>
    %3 = tpu.matmul %1, %2, %cst {dimension_numbers = #tpu.dot_dimension_numbers<[1], [0], [0], [1], [0, 0, 1, 1], [], []>} : vector<8x128xbf16>, vector<128x128xbf16>, vector<8x128xf32> -> vector<8x128xf32>
    %c0_3 = arith.constant 0 : index
    %c0_4 = arith.constant 0 : index
    %4 = vector.load %arg4[%c0_3, %c0_4] : memref<1x128xf32, #tpu.memory_space<vmem>>, vector<1x128xf32>
    %5 = vector.broadcast %4 : vector<1x128xf32> to vector<8x128xf32>
    %6 = arith.addf %3, %5 : vector<8x128xf32>
    %cst_5 = arith.constant 0.000000e+00 : f32
    %7 = vector.broadcast %cst_5 : f32 to vector<8x128xf32>
    %8 = arith.maximumf %6, %7 : vector<8x128xf32>
    %9 = arith.truncf %8 : vector<8x128xf32> to vector<8x128xbf16>
    %c0_6 = arith.constant 0 : index
    %c0_7 = arith.constant 0 : index
    %10 = vector.load %arg5[%c0_6, %c0_7] : memref<128x128xbf16, #tpu.memory_space<vmem>>, vector<128x128xbf16>
    %cst_8 = arith.constant dense<0.000000e+00> : vector<8x128xf32>
    %11 = tpu.matmul %9, %10, %cst_8 {dimension_numbers = #tpu.dot_dimension_numbers<[1], [0], [0], [1], [0, 0, 1, 1], [], []>} : vector<8x128xbf16>, vector<128x128xbf16>, vector<8x128xf32> -> vector<8x128xf32>
    %c0_9 = arith.constant 0 : index
    %c0_10 = arith.constant 0 : index
    %12 = vector.load %arg6[%c0_9, %c0_10] : memref<1x128xf32, #tpu.memory_space<vmem>>, vector<1x128xf32>
    %13 = vector.broadcast %12 : vector<1x128xf32> to vector<8x128xf32>
    %14 = arith.addf %11, %13 : vector<8x128xf32>
    %c0_11 = arith.constant 0 : index
    %c0_12 = arith.constant 0 : index
    %15 = vector.load %arg7[%c0_11, %c0_12] : memref<8x128xf32, #tpu.memory_space<vmem>>, vector<8x128xf32>
    tpu.vector_store %arg7[%c0_11, %c0_12], %14 {strides = array<i32>} : memref<8x128xf32, #tpu.memory_space<vmem>>, vector<8x128xf32>,
    return
  }
  func.func @transform_0(%arg0: i32, %arg1: i32) -> (i32, i32) {
    %c0_i32 = arith.constant 0 : i32
    %c0_i32_0 = arith.constant 0 : i32
    return %arg0, %c0_i32 : i32, i32
  }
  func.func @transform_1(%arg0: i32, %arg1: i32) -> (i32, i32) {
    %c0_i32 = arith.constant 0 : i32
    %c0_i32_0 = arith.constant 0 : i32
    %c0_i32_1 = arith.constant 0 : i32
    return %c0_i32, %c0_i32_0 : i32, i32
  }
  func.func @transform_2(%arg0: i32, %arg1: i32) -> (i32, i32) {
    %c0_i32 = arith.constant 0 : i32
    %c0_i32_0 = arith.constant 0 : i32
    %c0_i32_1 = arith.constant 0 : i32
    return %c0_i32, %c0_i32_0 : i32, i32
  }
  func.func @transform_3(%arg0: i32, %arg1: i32) -> (i32, i32) {
    %c0_i32 = arith.constant 0 : i32
    %c0_i32_0 = arith.constant 0 : i32
    return %c0_i32, %arg1 : i32, i32
  }
  func.func @transform_4(%arg0: i32, %arg1: i32) -> (i32, i32) {
    %c0_i32 = arith.constant 0 : i32
    %c0_i32_0 = arith.constant 0 : i32
    return %c0_i32, %arg1 : i32, i32
  }
  func.func @transform_5(%arg0: i32, %arg1: i32) -> (i32, i32) {
    %c0_i32 = arith.constant 0 : i32
    return %arg0, %arg1 : i32, i32
  }
}

</mosaic_0001>

<llo_original>
// kernel: _two_layer_forward.1
$region0: #{_two_layer_forward.1}
  #allocation0 [shape = 'u32[]', space=smem, size = 0x4, offset = 0x4, fixed_abs, tag = 'smem constant byte address 0x4 - core index']
  #allocation1 [shape = 'u32[72,128]{1,0:T(1,128)}', space=vmem, size = 0x9000, scoped, tag = 'internal scratch']
  %s0 = inlined_call_operand.vmem [shape: f32[8,128], index: 0, kind: input, shape index: {}]
  %s1 = inlined_call_operand.hbm [shape: bf16[128,128], index: 1, kind: input, shape index: {}]
  %s2 = inlined_call_operand.vmem [shape: f32[1,128], index: 2, kind: input, shape index: {}]
  %s3 = inlined_call_operand.hbm [shape: bf16[128,128], index: 3, kind: input, shape index: {}]
  %s4 = inlined_call_operand.vmem [shape: f32[1,128], index: 4, kind: input, shape index: {}]
  %s5 = inlined_call_operand.hbm [shape: f32[8,128], index: 5, kind: output, shape index: {}]
  %s6 = sld [smem:[#allocation0]]
  $region38: #{_two_layer_forward.1} parent=0
    _
  %s8 = ssub.s32 1, %s6
  %s9 = scalar_select 0, %s8, %s6
  $region1: #{_two_layer_forward.1} parent=0
    #allocation2 [shape = 'u8[32768]{0}', space=vmem, size = 0x8000, scoped, tag = 'input window, operand 1, single buffered']
    #allocation3 [shape = 's32[1]{0}', space=sflag, size = 0x4, scoped, tag = 'scoped memory for _two_layer_forward.1']
    #allocation4 [shape = 's32[1]{0}', space=sflag, size = 0x4, scoped, tag = 'scoped memory for _two_layer_forward.1']
    #allocation5 [shape = 'u8[32768]{0}', space=vmem, size = 0x8000, scoped, tag = 'input window, operand 3, single buffered']
    #allocation6 [shape = 's32[1]{0}', space=sflag, size = 0x4, scoped, tag = 'scoped memory for _two_layer_forward.1']
    #allocation7 [shape = 'u8[4096]{0}', space=vmem, size = 0x1000, scoped, tag = 'output window, operand 0, single buffered']
    %10 = vsyncpa [#allocation3], 0
    %11 = vsyncpa [#allocation6], 0
    %12 = vsyncpa [#allocation4], 0
    // Predicated region
    $region2: #{_two_layer_forward.1} parent=1 // pred_check
      _
    $region3: #{_two_layer_forward.1} parent=1 // pred_check_branch
      %14 = sbr.rel (0) target = $region5
    $region4: #{_two_layer_forward.1} parent=1 // pred_region
      _
    $region5: #{_two_layer_forward.1} parent=1 // pred_fallthru
      _
    // Predicated region
    $region6: #{_two_layer_forward.1} parent=1 // pred_check
      _
    $region7: #{_two_layer_forward.1} parent=1 // pred_check_branch
      %16 = sbr.rel (0) target = $region9
    $region8: #{_two_layer_forward.1} parent=1 // pred_region
      %18 = vsyncadd [#allocation3], 0
      %s19 = sshll.u32 %s1, 4
      %s20 = int_to_ptr.hbm [resolvable:$true] %s19
      %s21 = sshll.u32 [#allocation2], 4
      %s22 = int_to_ptr.vmem [resolvable:$true] %s21
      %27 = dma.hbm_to_vmem [thread:$0]  %s20, 1024, %s22, [#allocation3], 64, 64, 4
    $region9: #{_two_layer_forward.1} parent=1 // pred_fallthru
      _
    // Predicated region
    $region10: #{_two_layer_forward.1} parent=1 // pred_check
      _
    $region11: #{_two_layer_forward.1} parent=1 // pred_check_branch
      %29 = sbr.rel (0) target = $region13
    $region12: #{_two_layer_forward.1} parent=1 // pred_region
      _
    $region13: #{_two_layer_forward.1} parent=1 // pred_fallthru
      _
    // Predicated region
    $region14: #{_two_layer_forward.1} parent=1 // pred_check
      _
    $region15: #{_two_layer_forward.1} parent=1 // pred_check_branch
      %31 = sbr.rel (0) target = $region17
    $region16: #{_two_layer_forward.1} parent=1 // pred_region
      %33 = vsyncadd [#allocation6], 0
      %s34 = sshll.u32 %s3, 4
      %s35 = int_to_ptr.hbm [resolvable:$true] %s34
      %s36 = sshll.u32 [#allocation5], 4
      %s37 = int_to_ptr.vmem [resolvable:$true] %s36
      %42 = dma.hbm_to_vmem [thread:$0]  %s35, 1024, %s37, [#allocation6], 64, 64, 4
    $region17: #{_two_layer_forward.1} parent=1 // pred_fallthru
      _
    // Predicated region
    $region18: #{_two_layer_forward.1} parent=1 // pred_check
      _
    $region19: #{_two_layer_forward.1} parent=1 // pred_check_branch
      %44 = sbr.rel (0) target = $region21
    $region20: #{_two_layer_forward.1} parent=1 // pred_region
      _
    $region21: #{_two_layer_forward.1} parent=1 // pred_fallthru
      _
    // Predicated region
    $region22: #{_two_layer_forward.1} parent=1 // pred_check
      _
    $region23: #{_two_layer_forward.1} parent=1 // pred_check_branch
      %46 = sbr.rel (0) target = $region25
    $region24: #{_two_layer_forward.1} parent=1 // pred_region
      %48 = dma.done [#allocation3], 1024
    $region25: #{_two_layer_forward.1} parent=1 // pred_fallthru
      _
    // Predicated region
    $region26: #{_two_layer_forward.1} parent=1 // pred_check
      _
    $region27: #{_two_layer_forward.1} parent=1 // pred_check_branch
      %50 = sbr.rel (0) target = $region29
    $region28: #{_two_layer_forward.1} parent=1 // pred_region
      %52 = dma.done [#allocation6], 1024
    $region29: #{_two_layer_forward.1} parent=1 // pred_fallthru
      _
    %v53 = vld [vmem:[%s0] sm:$0xff]
    %v54 = vpack.c.bf16 %v53, %v53
    %v55 = vld [vmem:[#allocation2] sm:$0xf]
    %v56 = vld [vmem:[#allocation2 + $0x4] sm:$0xf]
    %v57 = vld [vmem:[#allocation2 + $0x8] sm:$0xf]
    %v58 = vld [vmem:[#allocation2 + $0xc] sm:$0xf]
    %v59 = vld [vmem:[#allocation2 + $0x10] sm:$0xf]
    %v60 = vld [vmem:[#allocation2 + $0x14] sm:$0xf]
    %v61 = vld [vmem:[#allocation2 + $0x18] sm:$0xf]
    %v62 = vld [vmem:[#allocation2 + $0x1c] sm:$0xf]
    %v63 = vld [vmem:[#allocation2 + $0x20] sm:$0xf]
    %v64 = vld [vmem:[#allocation2 + $0x24] sm:$0xf]
    %v65 = vld [vmem:[#allocation2 + $0x28] sm:$0xf]
    %v66 = vld [vmem:[#allocation2 + $0x2c] sm:$0xf]
    %v67 = vld [vmem:[#allocation2 + $0x30] sm:$0xf]
    %v68 = vld [vmem:[#allocation2 + $0x34] sm:$0xf]
    %v69 = vld [vmem:[#allocation2 + $0x38] sm:$0xf]
    %v70 = vld [vmem:[#allocation2 + $0x3c] sm:$0xf]
    %v71 = vld [vmem:[%s2] sm:$0x1]
    %v73 = vperm.slane %v71, 0
    %v91 = vunpack.c.l.b16 %v55
    %v92 = vunpack.c.l.b16 %v56
    %v93 = vunpack.c.l.b16 %v57
    %v94 = vunpack.c.l.b16 %v58
    %v95 = vunpack.c.l.b16 %v59
    %v96 = vunpack.c.l.b16 %v60
    %v97 = vunpack.c.l.b16 %v61
    %v98 = vunpack.c.l.b16 %v62
    %v99 = vunpack.c.l.b16 %v63
    %v100 = vunpack.c.l.b16 %v64
    %v101 = vunpack.c.l.b16 %v65
    %v102 = vunpack.c.l.b16 %v66
    %v103 = vunpack.c.l.b16 %v67
    %v104 = vunpack.c.l.b16 %v68
    %v105 = vunpack.c.l.b16 %v69
    %v106 = vunpack.c.l.b16 %v70
    %v107 = vpack.c.b16 %v92, %v91
    %v108 = vpack.c.b16 %v94, %v93
    %v109 = vpack.c.b16 %v96, %v95
    %v110 = vpack.c.b16 %v98, %v97
    %v111 = vpack.c.b16 %v100, %v99
    %v112 = vpack.c.b16 %v102, %v101
    %v113 = vpack.c.b16 %v104, %v103
    %v114 = vpack.c.b16 %v106, %v105
    %123 = vmatpush.bf16.msra.mxu0 %v114
    %124 = vmatpush.bf16.msra.mxu0 %v113
    %125 = vmatpush.bf16.msra.mxu0 %v112
    %126 = vmatpush.bf16.msra.mxu0 %v111
    %127 = vmatpush.bf16.msra.mxu0 %v110
    %128 = vmatpush.bf16.msra.mxu0 %v109
    %129 = vmatpush.bf16.msra.mxu0 %v108
    %130 = vmatpush.bf16.msra.mxu0 %v107
    %131 = vmatmul.bf16.gmra.mxu0 %v54
    %v132 = vpop.f32.mrf.mxu0
    %v133 = vadd.f32 %v73, %v132
    %v134 = vpop.f32.mrf.mxu0
    %135 = vdwg.mxu0
    %v136 = vmax.f32 %v133, 0.0
    %v137 = vpack.c.bf16 %v136, %v136
    %v138 = vld [vmem:[#allocation5] sm:$0xf]
    %v139 = vld [vmem:[#allocation5 + $0x4] sm:$0xf]
    %v140 = vld [vmem:[#allocation5 + $0x8] sm:$0xf]
    %v141 = vld [vmem:[#allocation5 + $0xc] sm:$0xf]
    %v142 = vld [vmem:[#allocation5 + $0x10] sm:$0xf]
    %v143 = vld [vmem:[#allocation5 + $0x14] sm:$0xf]
    %v144 = vld [vmem:[#allocation5 + $0x18] sm:$0xf]
    %v145 = vld [vmem:[#allocation5 + $0x1c] sm:$0xf]
    %v146 = vld [vmem:[#allocation5 + $0x20] sm:$0xf]
    %v147 = vld [vmem:[#allocation5 + $0x24] sm:$0xf]
    %v148 = vld [vmem:[#allocation5 + $0x28] sm:$0xf]
    %v149 = vld [vmem:[#allocation5 + $0x2c] sm:$0xf]
    %v150 = vld [vmem:[#allocation5 + $0x30] sm:$0xf]
    %v151 = vld [vmem:[#allocation5 + $0x34] sm:$0xf]
    %v152 = vld [vmem:[#allocation5 + $0x38] sm:$0xf]
    %v153 = vld [vmem:[#allocation5 + $0x3c] sm:$0xf]
    %v154 = vld [vmem:[%s4] sm:$0x1]
    %v156 = vperm.slane %v154, 0
    %v174 = vunpack.c.l.b16 %v138
    %v175 = vunpack.c.l.b16 %v139
    %v176 = vunpack.c.l.b16 %v140
    %v177 = vunpack.c.l.b16 %v141
    %v178 = vunpack.c.l.b16 %v142
    %v179 = vunpack.c.l.b16 %v143
    %v180 = vunpack.c.l.b16 %v144
    %v181 = vunpack.c.l.b16 %v145
    %v182 = vunpack.c.l.b16 %v146
    %v183 = vunpack.c.l.b16 %v147
    %v184 = vunpack.c.l.b16 %v148
    %v185 = vunpack.c.l.b16 %v149
    %v186 = vunpack.c.l.b16 %v150
    %v187 = vunpack.c.l.b16 %v151
    %v188 = vunpack.c.l.b16 %v152
    %v189 = vunpack.c.l.b16 %v153
    %v190 = vpack.c.b16 %v175, %v174
    %v191 = vpack.c.b16 %v177, %v176
    %v192 = vpack.c.b16 %v179, %v178
    %v193 = vpack.c.b16 %v181, %v180
    %v194 = vpack.c.b16 %v183, %v182
    %v195 = vpack.c.b16 %v185, %v184
    %v196 = vpack.c.b16 %v187, %v186
    %v197 = vpack.c.b16 %v189, %v188
    %206 = vmatpush.bf16.msra.mxu0 %v197
    %207 = vmatpush.bf16.msra.mxu0 %v196
    %208 = vmatpush.bf16.msra.mxu0 %v195
    %209 = vmatpush.bf16.msra.mxu0 %v194
    %210 = vmatpush.bf16.msra.mxu0 %v193
    %211 = vmatpush.bf16.msra.mxu0 %v192
    %212 = vmatpush.bf16.msra.mxu0 %v191
    %213 = vmatpush.bf16.msra.mxu0 %v190
    %214 = vmatmul.bf16.gmra.mxu0 %v137
    %v215 = vpop.f32.mrf.mxu0
    %v216 = vadd.f32 %v156, %v215
    %v217 = vpop.f32.mrf.mxu0
    %218 = vdwg.mxu0
    %219 = vst [vmem:[#allocation7] sm:$0xff] %v216
    // Predicated region
    $region30: #{_two_layer_forward.1} parent=1 // pred_check
      _
    $region31: #{_two_layer_forward.1} parent=1 // pred_check_branch
      %221 = sbr.rel (0) target = $region33
    $region32: #{_two_layer_forward.1} parent=1 // pred_region
      %223 = vsyncadd [#allocation4], 0
      %s225 = sshll.u32 [#allocation7], 4
      %s226 = int_to_ptr.vmem [resolvable:$true] %s225
      %s227 = sshll.u32 %s5, 4
      %s228 = int_to_ptr.hbm [resolvable:$true] %s227
      %230 = dma.vmem_to_hbm [thread:$0]  %s226, 128, %s228, [#allocation4]
    $region33: #{_two_layer_forward.1} parent=1 // pred_fallthru
      _
    // Predicated region
    $region34: #{_two_layer_forward.1} parent=1 // pred_check
      _
    $region35: #{_two_layer_forward.1} parent=1 // pred_check_branch
      %232 = sbr.rel (0) target = $region37
    $region36: #{_two_layer_forward.1} parent=1 // pred_region
      %234 = dma.done [#allocation4], 128
    $region37: #{_two_layer_forward.1} parent=1 // pred_fallthru
      _
    %235 = vsyncpa [#allocation3], 1
    %236 = vsyncpa [#allocation6], 1
    %237 = vsyncpa [#allocation4], 1

// kernel: _two_layer_forward.1
$region0: #{_two_layer_forward.1}
  #allocation0 [shape = 'u32[]', space=smem, size = 0x4, offset = 0x4, fixed_abs, tag = 'smem constant byte address 0x4 - core index']
  #allocation1 [shape = 'u32[72,128]{1,0:T(1,128)}', space=vmem, size = 0x9000, scoped, tag = 'internal scratch']
  %s0 = inlined_call_operand.vmem [shape: f32[8,128], index: 0, kind: input, shape index: {}]
  %s1 = inlined_call_operand.hbm [shape: bf16[128,128], index: 1, kind: input, shape index: {}]
  %s2 = inlined_call_operand.vmem [shape: f32[1,128], index: 2, kind: input, shape index: {}]
  %s3 = inlined_call_operand.hbm [shape: bf16[128,128], index: 3, kind: input, shape index: {}]
  %s4 = inlined_call_operand.vmem [shape: f32[1,128], index: 4, kind: input, shape index: {}]
  %s5 = inlined_call_operand.hbm [shape: f32[8,128], index: 5, kind: output, shape index: {}]
  %s6 = sld [smem:[#allocation0]]
  $region38: #{_two_layer_forward.1} parent=0
    _
  %s8 = ssub.s32 1, %s6
  %s9 = scalar_select 0, %s8, %s6
  $region1: #{_two_layer_forward.1} parent=0
    #allocation2 [shape = 'u8[32768]{0}', space=vmem, size = 0x8000, scoped, tag = 'input window, operand 1, single buffered']
    #allocation3 [shape = 's32[1]{0}', space=sflag, size = 0x4, scoped, tag = 'scoped memory for _two_layer_forward.1']
    #allocation4 [shape = 's32[1]{0}', space=sflag, size = 0x4, scoped, tag = 'scoped memory for _two_layer_forward.1']
    #allocation5 [shape = 'u8[32768]{0}', space=vmem, size = 0x8000, scoped, tag = 'input window, operand 3, single buffered']
    #allocation6 [shape = 's32[1]{0}', space=sflag, size = 0x4, scoped, tag = 'scoped memory for _two_layer_forward.1']
    #allocation7 [shape = 'u8[4096]{0}', space=vmem, size = 0x1000, scoped, tag = 'output window, operand 0, single buffered']
    %10 = vsyncpa [#allocation3], 0
    %11 = vsyncpa [#allocation6], 0
    %12 = vsyncpa [#allocation4], 0
    // Predicated region
    $region2: #{_two_layer_forward.1} parent=1 // pred_check
      _
    $region3: #{_two_layer_forward.1} parent=1 // pred_check_branch
      %14 = sbr.rel (0) target = $region5
    $region4: #{_two_layer_forward.1} parent=1 // pred_region
      _
    $region5: #{_two_layer_forward.1} parent=1 // pred_fallthru
      _
    // Predicated region
    $region6: #{_two_layer_forward.1} parent=1 // pred_check
      _
    $region7: #{_two_layer_forward.1} parent=1 // pred_check_branch
      %16 = sbr.rel (0) target = $region9
    $region8: #{_two_layer_forward.1} parent=1 // pred_region
      %18 = vsyncadd [#allocation3], 0
      %s19 = sshll.u32 %s1, 4
      %s20 = int_to_ptr.hbm [resolvable:$true] %s19
      %s21 = sshll.u32 [#allocation2], 4
      %s22 = int_to_ptr.vmem [resolvable:$true] %s21
      %27 = dma.hbm_to_vmem [thread:$0]  %s20, 1024, %s22, [#allocation3], 64, 64, 4
    $region9: #{_two_layer_forward.1} parent=1 // pred_fallthru
      _
    // Predicated region
    $region10: #{_two_layer_forward.1} parent=1 // pred_check
      _
    $region11: #{_two_layer_forward.1} parent=1 // pred_check_branch
      %29 = sbr.rel (0) target = $region13
    $region12: #{_two_layer_forward.1} parent=1 // pred_region
      _
    $region13: #{_two_layer_forward.1} parent=1 // pred_fallthru
      _
    // Predicated region
    $region14: #{_two_layer_forward.1} parent=1 // pred_check
      _
    $region15: #{_two_layer_forward.1} parent=1 // pred_check_branch
      %31 = sbr.rel (0) target = $region17
    $region16: #{_two_layer_forward.1} parent=1 // pred_region
      %33 = vsyncadd [#allocation6], 0
      %s34 = sshll.u32 %s3, 4
      %s35 = int_to_ptr.hbm [resolvable:$true] %s34
      %s36 = sshll.u32 [#allocation5], 4
      %s37 = int_to_ptr.vmem [resolvable:$true] %s36
      %42 = dma.hbm_to_vmem [thread:$0]  %s35, 1024, %s37, [#allocation6], 64, 64, 4
    $region17: #{_two_layer_forward.1} parent=1 // pred_fallthru
      _
    // Predicated region
    $region18: #{_two_layer_forward.1} parent=1 // pred_check
      _
    $region19: #{_two_layer_forward.1} parent=1 // pred_check_branch
      %44 = sbr.rel (0) target = $region21
    $region20: #{_two_layer_forward.1} parent=1 // pred_region
      _
    $region21: #{_two_layer_forward.1} parent=1 // pred_fallthru
      _
    // Predicated region
    $region22: #{_two_layer_forward.1} parent=1 // pred_check
      _
    $region23: #{_two_layer_forward.1} parent=1 // pred_check_branch
      %46 = sbr.rel (0) target = $region25
    $region24: #{_two_layer_forward.1} parent=1 // pred_region
      %48 = dma.done [#allocation3], 1024
    $region25: #{_two_layer_forward.1} parent=1 // pred_fallthru
      _
    // Predicated region
    $region26: #{_two_layer_forward.1} parent=1 // pred_check
      _
    $region27: #{_two_layer_forward.1} parent=1 // pred_check_branch
      %50 = sbr.rel (0) target = $region29
    $region28: #{_two_layer_forward.1} parent=1 // pred_region
      %52 = dma.done [#allocation6], 1024
    $region29: #{_two_layer_forward.1} parent=1 // pred_fallthru
      _
    %v53 = vld [vmem:[%s0] sm:$0xff]
    %v54 = vpack.c.bf16 %v53, %v53
    %v55 = vld [vmem:[#allocation2] sm:$0xf]
    %v56 = vld [vmem:[#allocation2 + $0x4] sm:$0xf]
    %v57 = vld [vmem:[#allocation2 + $0x8] sm:$0xf]
    %v58 = vld [vmem:[#allocation2 + $0xc] sm:$0xf]
    %v59 = vld [vmem:[#allocation2 + $0x10] sm:$0xf]
    %v60 = vld [vmem:[#allocation2 + $0x14] sm:$0xf]
    %v61 = vld [vmem:[#allocation2 + $0x18] sm:$0xf]
    %v62 = vld [vmem:[#allocation2 + $0x1c] sm:$0xf]
    %v63 = vld [vmem:[#allocation2 + $0x20] sm:$0xf]
    %v64 = vld [vmem:[#allocation2 + $0x24] sm:$0xf]
    %v65 = vld [vmem:[#allocation2 + $0x28] sm:$0xf]
    %v66 = vld [vmem:[#allocation2 + $0x2c] sm:$0xf]
    %v67 = vld [vmem:[#allocation2 + $0x30] sm:$0xf]
    %v68 = vld [vmem:[#allocation2 + $0x34] sm:$0xf]
    %v69 = vld [vmem:[#allocation2 + $0x38] sm:$0xf]
    %v70 = vld [vmem:[#allocation2 + $0x3c] sm:$0xf]
    %v71 = vld [vmem:[%s2] sm:$0x1]
    %v73 = vperm.slane %v71, 0
    %v91 = vunpack.c.l.b16 %v55
    %v92 = vunpack.c.l.b16 %v56
    %v93 = vunpack.c.l.b16 %v57
    %v94 = vunpack.c.l.b16 %v58
    %v95 = vunpack.c.l.b16 %v59
    %v96 = vunpack.c.l.b16 %v60
    %v97 = vunpack.c.l.b16 %v61
    %v98 = vunpack.c.l.b16 %v62
    %v99 = vunpack.c.l.b16 %v63
    %v100 = vunpack.c.l.b16 %v64
    %v101 = vunpack.c.l.b16 %v65
    %v102 = vunpack.c.l.b16 %v66
    %v103 = vunpack.c.l.b16 %v67
    %v104 = vunpack.c.l.b16 %v68
    %v105 = vunpack.c.l.b16 %v69
    %v106 = vunpack.c.l.b16 %v70
    %v107 = vpack.c.b16 %v92, %v91
    %v108 = vpack.c.b16 %v94, %v93
    %v109 = vpack.c.b16 %v96, %v95
    %v110 = vpack.c.b16 %v98, %v97
    %v111 = vpack.c.b16 %v100, %v99
    %v112 = vpack.c.b16 %v102, %v101
    %v113 = vpack.c.b16 %v104, %v103
    %v114 = vpack.c.b16 %v106, %v105
    %123 = vmatpush.bf16.msra.mxu0 %v114
    %124 = vmatpush.bf16.msra.mxu0 %v113
    %125 = vmatpush.bf16.msra.mxu0 %v112
    %126 = vmatpush.bf16.msra.mxu0 %v111
    %127 = vmatpush.bf16.msra.mxu0 %v110
    %128 = vmatpush.bf16.msra.mxu0 %v109
    %129 = vmatpush.bf16.msra.mxu0 %v108
    %130 = vmatpush.bf16.msra.mxu0 %v107
    %131 = vmatmul.bf16.gmra.mxu0 %v54
    %v132 = vpop.f32.mrf.mxu0
    %v133 = vadd.f32 %v73, %v132
    %v134 = vpop.f32.mrf.mxu0
    %135 = vdwg.mxu0
    %v136 = vmax.f32 %v133, 0.0
    %v137 = vpack.c.bf16 %v136, %v136
    %v138 = vld [vmem:[#allocation5] sm:$0xf]
    %v139 = vld [vmem:[#allocation5 + $0x4] sm:$0xf]
    %v140 = vld [vmem:[#allocation5 + $0x8] sm:$0xf]
    %v141 = vld [vmem:[#allocation5 + $0xc] sm:$0xf]
    %v142 = vld [vmem:[#allocation5 + $0x10] sm:$0xf]
    %v143 = vld [vmem:[#allocation5 + $0x14] sm:$0xf]
    %v144 = vld [vmem:[#allocation5 + $0x18] sm:$0xf]
    %v145 = vld [vmem:[#allocation5 + $0x1c] sm:$0xf]
    %v146 = vld [vmem:[#allocation5 + $0x20] sm:$0xf]
    %v147 = vld [vmem:[#allocation5 + $0x24] sm:$0xf]
    %v148 = vld [vmem:[#allocation5 + $0x28] sm:$0xf]
    %v149 = vld [vmem:[#allocation5 + $0x2c] sm:$0xf]
    %v150 = vld [vmem:[#allocation5 + $0x30] sm:$0xf]
    %v151 = vld [vmem:[#allocation5 + $0x34] sm:$0xf]
    %v152 = vld [vmem:[#allocation5 + $0x38] sm:$0xf]
    %v153 = vld [vmem:[#allocation5 + $0x3c] sm:$0xf]
    %v154 = vld [vmem:[%s4] sm:$0x1]
    %v156 = vperm.slane %v154, 0
    %v174 = vunpack.c.l.b16 %v138
    %v175 = vunpack.c.l.b16 %v139
    %v176 = vunpack.c.l.b16 %v140
    %v177 = vunpack.c.l.b16 %v141
    %v178 = vunpack.c.l.b16 %v142
    %v179 = vunpack.c.l.b16 %v143
    %v180 = vunpack.c.l.b16 %v144
    %v181 = vunpack.c.l.b16 %v145
    %v182 = vunpack.c.l.b16 %v146
    %v183 = vunpack.c.l.b16 %v147
    %v184 = vunpack.c.l.b16 %v148
    %v185 = vunpack.c.l.b16 %v149
    %v186 = vunpack.c.l.b16 %v150
    %v187 = vunpack.c.l.b16 %v151
    %v188 = vunpack.c.l.b16 %v152
    %v189 = vunpack.c.l.b16 %v153
    %v190 = vpack.c.b16 %v175, %v174
    %v191 = vpack.c.b16 %v177, %v176
    %v192 = vpack.c.b16 %v179, %v178
    %v193 = vpack.c.b16 %v181, %v180
    %v194 = vpack.c.b16 %v183, %v182
    %v195 = vpack.c.b16 %v185, %v184
    %v196 = vpack.c.b16 %v187, %v186
    %v197 = vpack.c.b16 %v189, %v188
    %206 = vmatpush.bf16.msra.mxu0 %v197
    %207 = vmatpush.bf16.msra.mxu0 %v196
    %208 = vmatpush.bf16.msra.mxu0 %v195
    %209 = vmatpush.bf16.msra.mxu0 %v194
    %210 = vmatpush.bf16.msra.mxu0 %v193
    %211 = vmatpush.bf16.msra.mxu0 %v192
    %212 = vmatpush.bf16.msra.mxu0 %v191
    %213 = vmatpush.bf16.msra.mxu0 %v190
    %214 = vmatmul.bf16.gmra.mxu0 %v137
    %v215 = vpop.f32.mrf.mxu0
    %v216 = vadd.f32 %v156, %v215
    %v217 = vpop.f32.mrf.mxu0
    %218 = vdwg.mxu0
    %219 = vst [vmem:[#allocation7] sm:$0xff] %v216
    // Predicated region
    $region30: #{_two_layer_forward.1} parent=1 // pred_check
      _
    $region31: #{_two_layer_forward.1} parent=1 // pred_check_branch
      %221 = sbr.rel (0) target = $region33
    $region32: #{_two_layer_forward.1} parent=1 // pred_region
      %223 = vsyncadd [#allocation4], 0
      %s225 = sshll.u32 [#allocation7], 4
      %s226 = int_to_ptr.vmem [resolvable:$true] %s225
      %s227 = sshll.u32 %s5, 4
      %s228 = int_to_ptr.hbm [resolvable:$true] %s227
      %230 = dma.vmem_to_hbm [thread:$0]  %s226, 128, %s228, [#allocation4]
    $region33: #{_two_layer_forward.1} parent=1 // pred_fallthru
      _
    // Predicated region
    $region34: #{_two_layer_forward.1} parent=1 // pred_check
      _
    $region35: #{_two_layer_forward.1} parent=1 // pred_check_branch
      %232 = sbr.rel (0) target = $region37
    $region36: #{_two_layer_forward.1} parent=1 // pred_region
      %234 = dma.done [#allocation4], 128
    $region37: #{_two_layer_forward.1} parent=1 // pred_fallthru
      _
    %235 = vsyncpa [#allocation3], 1
    %236 = vsyncpa [#allocation6], 1
    %237 = vsyncpa [#allocation4], 1

</llo_original>
